<compile_context>
chip_gen: v7x
topology: tpu7x:2x2x1
jax: 0.10.0
libtpu: 0.0.40
codegen_flags: <defaults>
</compile_context>

<pallas_src>
import functools
import math

import jax
import jax.numpy as jnp
from jax.experimental import pallas as pl
from jax.experimental.pallas import tpu as pltpu

_LANE = 128
_SUBLANE = 8
# Keep 2 * (1 + n_copies) double-buffered tiles comfortably under the 32 MiB
# scoped VMEM limit (and well under v7x's 64 MiB physical VMEM).
_VMEM_BUDGET_BYTES = 24 << 20
_MAX_TILE_BYTES = 4 << 20


def _copy_kernel(x_ref, *out_refs):
    # One VMEM load per tile, one lane-dense store per requested copy.
    v = x_ref[...]
    for o_ref in out_refs:
        o_ref[...] = v


def _choose_lanes(total, itemsize, tile_bytes):
    """Largest lane width (multiple of 128) dividing `total`, preferring ones
    whose minimal (8, lanes) tile still fits the per-tile byte budget."""
    candidates = (8192, 4096, 2048, 1024, 512, 256, 128)
    for l in candidates:
        if total % l == 0 and _SUBLANE * l * itemsize <= tile_bytes:
            return l
    for l in candidates:
        if total % l == 0:
            return l
    return None


def _pallas_copies(flat2d, n_copies, tile_rows):
    rows, lanes = flat2d.shape
    spec = pl.BlockSpec((tile_rows, lanes), lambda r: (r, 0))
    out_shape = tuple(
        jax.ShapeDtypeStruct(flat2d.shape, flat2d.dtype) for _ in range(n_copies)
    )
    out_specs = tuple(spec for _ in range(n_copies))
    return pl.pallas_call(
        _copy_kernel,
        out_shape=out_shape,
        grid=(pl.cdiv(rows, tile_rows),),
        in_specs=[spec],
        out_specs=out_specs,
        compiler_params=pltpu.CompilerParams(
            dimension_semantics=("parallel",),   # shards row tiles across v7x's 2 TCs
            vmem_limit_bytes=32 << 20,
        ),
    )(flat2d)


@functools.partial(jax.jit, static_argnames=("n_times",))
def duplicate(x, n_times=2):
    """Returns a tuple of n_times arrays, each equal to x.

    Output 0 is x itself (PyTorch yields the same tensor object n_times), so
    only n_times-1 copies hit HBM: total traffic = 1 read + (n_times-1) writes.
    """
    if n_times <= 0:
        return ()
    if n_times == 1:
        return (x,)

    n_copies = n_times - 1
    total = math.prod(x.shape)
    itemsize = jnp.dtype(x.dtype).itemsize

    # Per-tile byte budget so double-buffered input + n_copies outputs fit VMEM.
    tile_bytes = max(
        _SUBLANE * _LANE * itemsize,
        min(_MAX_TILE_BYTES, _VMEM_BUDGET_BYTES // (2 * (1 + n_copies))),
    )

    flat = jnp.ravel(x)
    padded_total = total
    lanes = _choose_lanes(total, itemsize, tile_bytes)
    if lanes is None:
        # Pad the flat copy source up to a (8,128)-friendly size; copies are
        # sliced back below.  x itself is returned untouched.
        padded_total = pl.cdiv(total, _SUBLANE * _LANE) * (_SUBLANE * _LANE)
        flat = jnp.pad(flat, (0, padded_total - total))
        lanes = _choose_lanes(padded_total, itemsize, tile_bytes)
    rows = padded_total // lanes

    # Row-tile: multiple of 8 sublanes (or the full extent), ~tile_bytes big.
    tile_rows = max(_SUBLANE, (tile_bytes // (lanes * itemsize)) // _SUBLANE * _SUBLANE)
    if tile_rows >= rows:
        tile_rows = rows  # full extent is always a legal block dim

    flat2d = flat.reshape(rows, lanes)
    copies2d = _pallas_copies(flat2d, n_copies, tile_rows)

    outs = [x]
    for c in copies2d:
        c_flat = c.reshape(padded_total)
        if padded_total != total:
            c_flat = c_flat[:total]
        outs.append(c_flat.reshape(x.shape))
    return tuple(outs)


if __name__ == "__main__":
    key = jax.random.PRNGKey(0)
    x = jax.random.normal(key, (2, 4, 16, 16), dtype=jnp.float32)

    n_times = 2
    outs = duplicate(x, n_times=n_times)
    outs = jax.block_until_ready(outs)

    assert len(outs) == n_times
    for o in outs:
        assert o.shape == x.shape and o.dtype == x.dtype
        assert bool(jnp.all(o == x))

    # Also exercise a larger n_times to hit the multi-output copy path.
    outs3 = jax.block_until_ready(duplicate(x, n_times=3))
    assert len(outs3) == 3 and all(bool(jnp.all(o == x)) for o in outs3)

    print("KERNEL_OK")
</pallas_src>

<mosaic_0001>
module attributes {stable_mosaic.version = 11 : i64} {
  func.func @_copy_kernel(%arg0: i32, %arg1: memref<1x2048xf32, #tpu.memory_space<vmem>>, %arg2: memref<1x2048xf32, #tpu.memory_space<vmem>>) attributes {dimension_semantics = [#tpu.dimension_semantics<parallel>], iteration_bounds = array<i64: 1>, scalar_prefetch = 0 : i64, scratch_operands = 0 : i64, tpu.core_type = #tpu.core_type<tc>, window_params = [{transform_indices = @transform_0, window_bounds = array<i64: 1, 2048>}, {transform_indices = @transform_1, window_bounds = array<i64: 1, 2048>}]} {
    %c0 = arith.constant 0 : index
    %c0_0 = arith.constant 0 : index
    %0 = vector.load %arg1[%c0, %c0_0] : memref<1x2048xf32, #tpu.memory_space<vmem>>, vector<1x2048xf32>
    %c0_1 = arith.constant 0 : index
    %c0_2 = arith.constant 0 : index
    %1 = vector.load %arg2[%c0_1, %c0_2] : memref<1x2048xf32, #tpu.memory_space<vmem>>, vector<1x2048xf32>
    tpu.vector_store %arg2[%c0_1, %c0_2], %0 {strides = array<i32>} : memref<1x2048xf32, #tpu.memory_space<vmem>>, vector<1x2048xf32>,
    return
  }
  func.func @transform_0(%arg0: i32) -> (i32, i32) {
    %c0_i32 = arith.constant 0 : i32
    %c0_i32_0 = arith.constant 0 : i32
    return %arg0, %c0_i32 : i32, i32
  }
  func.func @transform_1(%arg0: i32) -> (i32, i32) {
    %c0_i32 = arith.constant 0 : i32
    %c0_i32_0 = arith.constant 0 : i32
    return %arg0, %c0_i32 : i32, i32
  }
}

</mosaic_0001>

<llo_original>
// kernel: duplicate.1
$region0: #{duplicate.1}
  #allocation0 [shape = 'u32[]', space=smem, size = 0x4, offset = 0x4, fixed_abs, tag = 'smem constant byte address 0x4 - core index']
  #allocation1 [shape = 'u32[144,128]{1,0:T(1,128)}', space=vmem, size = 0x12000, scoped, tag = 'internal scratch']
  %s0 = inlined_call_operand.vmem [shape: f32[1,2048], index: 0, kind: input, shape index: {}]
  %s1 = inlined_call_operand.vmem [shape: f32[1,2048], index: 1, kind: output, shape index: {}]
  %s2 = sld [smem:[#allocation0]]
  $region14: #{duplicate.1} parent=0
    _
  %s4 = ssub.s32 1, %s2
  %s5 = scalar_select 0, %s4, %s2
  // Predicated region
  $region2: #{duplicate.1} parent=0 // pred_check
    _
  $region3: #{duplicate.1} parent=0 // pred_check_branch
    %7 = sbr.rel (0) target = $region5
  $region4: #{duplicate.1} parent=0 // pred_region
    _
  $region5: #{duplicate.1} parent=0 // pred_fallthru
    _
  %v8 = vld [vmem:[%s0] sm:$0xff]
  %v9 = vld [vmem:[%s0 + $0x8] sm:$0xff]
  %10 = vst [vmem:[%s1] sm:$0xff] %v8
  %11 = vst [vmem:[%s1 + $0x8] sm:$0xff] %v9
  // Predicated region
  $region6: #{duplicate.1} parent=0 // pred_check
    _
  $region7: #{duplicate.1} parent=0 // pred_check_branch
    %13 = sbr.rel (0) target = $region9
  $region8: #{duplicate.1} parent=0 // pred_region
    _
  $region9: #{duplicate.1} parent=0 // pred_fallthru
    _
  // Predicated region
  $region10: #{duplicate.1} parent=0 // pred_check
    _
  $region11: #{duplicate.1} parent=0 // pred_check_branch
    %15 = sbr.rel (0) target = $region13
  $region12: #{duplicate.1} parent=0 // pred_region
    _
  $region13: #{duplicate.1} parent=0 // pred_fallthru
    _

</llo_original>
